<compile_context>
chip_gen: v7x
topology: tpu7x:2x2x1
jax: 0.10.0
libtpu: 0.0.40
codegen_flags: <defaults>
</compile_context>

<pallas_src>
import jax
import jax.numpy as jnp
from jax import lax
from jax.experimental import pallas as pl
from jax.experimental.pallas import tpu as pltpu


def _make_hbm_kernel(seq_tile, num_s, seq_len):
    """Gather embedding rows by manual HBM DMA, double-buffered across tiles."""

    def kernel(ids_ref,    # SMEM (B*S,) int32   (scalar prefetch)
               emb_hbm,    # HBM  (V, D)         (memory_space=ANY)
               w_ref,      # VMEM (O, D)         lane-dense weight
               out_ref,    # VMEM (1, O)         reward output block
               row_buf,    # VMEM (2, seq_tile, D) double-buffered rows
               acc_ref,    # VMEM (1, D) f32     running sequence sum
               sems):      # DMA sems (2,)       one per buffer slot
        b = pl.program_id(0)
        si = pl.program_id(1)
        slot = si % 2

        def issue_tile(tile_si, tile_slot):
            # All rows of one tile share sems[tile_slot]; drained below by a
            # single aggregate wait.  Scalar ids are read before any wait.
            base = b * seq_len + tile_si * seq_tile

            def body(t, carry):
                tok = ids_ref[base + t]
                pltpu.make_async_copy(
                    emb_hbm.at[pl.ds(tok, 1), :],
                    row_buf.at[tile_slot, pl.ds(t, 1), :],
                    sems.at[tile_slot],
                ).start()
                return carry

            lax.fori_loop(0, seq_tile, body, 0)

        @pl.when(si == 0)
        def _():
            acc_ref[...] = jnp.zeros_like(acc_ref)
            issue_tile(0, 0)                 # first tile of this batch row

        @pl.when(si < num_s - 1)
        def _():
            issue_tile(si + 1, 1 - slot)     # prefetch next tile (same batch)

        # Single aggregate wait drains all seq_tile row copies of this slot
        # (DMA sems count bytes; the slot buffer's size == sum of row copies).
        pltpu.make_async_copy(row_buf.at[slot], row_buf.at[slot],
                              sems.at[slot]).wait()

        # Partial sequence sum for this tile, accumulated in f32.
        acc_ref[...] += jnp.sum(row_buf[slot].astype(jnp.float32),
                                axis=0, keepdims=True)

        # Finalize: apply the reward head on the sequence sum.
        @pl.when(si == num_s - 1)
        def _():
            acc = acc_ref[...]                               # (1, D) f32
            w = w_ref[...].astype(jnp.float32)               # (O, D)
            out = jnp.sum(acc * w, axis=-1, keepdims=True)   # (O, 1)
            out_ref[...] = out.reshape(1, -1).astype(out_ref.dtype)

    return kernel


def _make_vmem_kernel(seq_tile, num_s, seq_len):
    """Whole embedding table resident in VMEM; gather via dynamic slices."""

    def kernel(ids_ref,    # SMEM (B*S,) int32   (scalar prefetch)
               tab_ref,    # VMEM (V, D)         whole table (constant block)
               w_ref,      # VMEM (O, D)
               out_ref,    # VMEM (1, O)
               acc_ref):   # VMEM (1, D) f32
        b = pl.program_id(0)
        si = pl.program_id(1)

        @pl.when(si == 0)
        def _():
            acc_ref[...] = jnp.zeros_like(acc_ref)

        base = b * seq_len + si * seq_tile

        def body(t, acc):
            tok = ids_ref[base + t]
            return acc + tab_ref[pl.ds(tok, 1), :].astype(jnp.float32)

        acc_ref[...] += lax.fori_loop(
            0, seq_tile, body, jnp.zeros(acc_ref.shape, jnp.float32))

        @pl.when(si == num_s - 1)
        def _():
            acc = acc_ref[...]
            w = w_ref[...].astype(jnp.float32)
            out = jnp.sum(acc * w, axis=-1, keepdims=True)
            out_ref[...] = out.reshape(1, -1).astype(out_ref.dtype)

    return kernel


def self_reward_forward(embedding_table, input_ids, weight, *,
                        seq_tile=None, table_in_vmem=None):
    """SelfRewardHead forward, output=None path.

    embedding_table: (V, D) float  -- stands in for `embedding_module`
    input_ids:       (B, S) int32
    weight:          (O, D) float  -- reward_head.weight (PyTorch layout)
    returns: reward_output (B, 1, O) float32, reward_labels (B,) float32
    """
    B, S = input_ids.shape
    V, D = embedding_table.shape
    O, Dw = weight.shape
    assert Dw == D, "weight must be (out_features, in_features)"

    if table_in_vmem is None:
        # VMEM-resident fast path for small tables (safe even doubled within
        # the 32 MiB scoped-VMEM default on all generations, incl. v7x).
        table_in_vmem = V * D * embedding_table.dtype.itemsize <= 4 * 1024 * 1024

    if seq_tile is None:
        # Largest divisor of S that is <= 512 (amortizes per-step overhead
        # and gives the DMA engine a deeper queue on the HBM path).
        seq_tile = next(t for t in range(min(S, 512), 0, -1) if S % t == 0)
    assert S % seq_tile == 0, "S must be divisible by seq_tile"
    num_s = S // seq_tile

    ids_flat = input_ids.reshape(-1).astype(jnp.int32)   # 1-D: no SMEM padding

    cost = pl.CostEstimate(
        flops=2 * B * S * D + 2 * B * O * D,
        transcendentals=0,
        bytes_accessed=(B * S * D * embedding_table.dtype.itemsize
                        + B * S * 4 + O * D * 4 + B * O * 4),
    )

    w_spec = pl.BlockSpec((O, D), lambda b, si, ids: (0, 0))
    out_spec = pl.BlockSpec((None, 1, O), lambda b, si, ids: (b, 0, 0))
    acc_scratch = pltpu.VMEM((1, D), jnp.float32)

    if table_in_vmem:
        kernel = _make_vmem_kernel(seq_tile, num_s, S)
        in_specs = [pl.BlockSpec((V, D), lambda b, si, ids: (0, 0)), w_spec]
        scratch_shapes = [acc_scratch]
    else:
        kernel = _make_hbm_kernel(seq_tile, num_s, S)
        in_specs = [pl.BlockSpec(memory_space=pl.ANY), w_spec]
        scratch_shapes = [
            pltpu.VMEM((2, seq_tile, D), embedding_table.dtype),  # double buffer
            acc_scratch,
            pltpu.SemaphoreType.DMA((2,)),                        # one per slot
        ]

    reward_out = pl.pallas_call(
        kernel,
        out_shape=jax.ShapeDtypeStruct((B, 1, O), jnp.float32),
        grid_spec=pltpu.PrefetchScalarGridSpec(
            num_scalar_prefetch=1,                 # flat input_ids -> SMEM
            grid=(B, num_s),
            in_specs=in_specs,
            out_specs=out_spec,
            scratch_shapes=scratch_shapes,
        ),
        compiler_params=pltpu.CompilerParams(
            dimension_semantics=("parallel", "arbitrary"),
        ),
        cost_estimate=cost,
    )(ids_flat, embedding_table, weight)

    # output=None path: every label is the constant 1.0 (no kernel output).
    reward_labels = jnp.ones((B,), jnp.float32)
    return reward_out, reward_labels


if __name__ == "__main__":
    B, S, D, V, O = 2, 8, 32, 64, 1  # batch, seq, in_features, vocab, out_features

    key = jax.random.PRNGKey(0)
    k_ids, k_emb, k_w = jax.random.split(key, 3)

    input_ids = jax.random.randint(k_ids, (B, S), 0, V, dtype=jnp.int32)
    emb_table = jax.random.normal(k_emb, (V, D), dtype=jnp.float32)
    bound = 1.0 / (D ** 0.5)  # deterministic stand-in for nn.Linear init
    weight = jax.random.uniform(k_w, (O, D), minval=-bound, maxval=bound,
                                dtype=jnp.float32)

    # Pure-JAX reference: the triangular prefix-sum's last row == sum over
    # the sequence, then the bias-free reward head.
    emb_ref = jnp.take(emb_table, input_ids, axis=0)                 # (B, S, D)
    ref_out = jnp.einsum('bd,od->bo', emb_ref.sum(axis=1), weight)[:, None, :]
    ref_lbl = jnp.ones((B,), jnp.float32)

    # 1) VMEM-resident-table fast path, 2 sequence tiles (init/finalize path).
    out_vmem, lbl_vmem = self_reward_forward(
        emb_table, input_ids, weight, seq_tile=4, table_in_vmem=True)
    # 2) HBM DMA-gather path, double-buffered across 2 sequence tiles.
    out_hbm, lbl_hbm = self_reward_forward(
        emb_table, input_ids, weight, seq_tile=4, table_in_vmem=False)
    # 3) HBM path with the default (single) sequence tile.
    out_hbm1, _ = self_reward_forward(
        emb_table, input_ids, weight, table_in_vmem=False)
    jax.block_until_ready((out_vmem, out_hbm, out_hbm1, lbl_vmem, lbl_hbm))

    for out in (out_vmem, out_hbm, out_hbm1):
        assert out.shape == (B, 1, O)
        assert jnp.allclose(out, ref_out, rtol=1e-5, atol=1e-5)
    assert lbl_vmem.shape == (B,) and jnp.allclose(lbl_vmem, ref_lbl)
    assert jnp.allclose(lbl_hbm, ref_lbl)

    print("KERNEL_OK")
</pallas_src>

<mosaic_0001>
module attributes {stable_mosaic.version = 11 : i64} {
  func.func @kernel(%arg0: i32, %arg1: i32, %arg2: memref<16xi32, #tpu.memory_space<smem>>, %arg3: memref<64x32xf32, #tpu.memory_space<vmem>>, %arg4: memref<1x32xf32, #tpu.memory_space<vmem>>, %arg5: memref<1x1x1xf32, #tpu.memory_space<vmem>>, %arg6: memref<1x32xf32, #tpu.memory_space<vmem>>) attributes {dimension_semantics = [#tpu.dimension_semantics<parallel>, #tpu.dimension_semantics<arbitrary>], iteration_bounds = array<i64: 2, 2>, scalar_prefetch = 1 : i64, scratch_operands = 1 : i64, tpu.core_type = #tpu.core_type<tc>, window_params = [{pipeline_mode = #tpu.pipeline_mode<synchronous>, transform_indices = @transform_0, window_bounds = array<i64: 64, 32>}, {pipeline_mode = #tpu.pipeline_mode<synchronous>, transform_indices = @transform_1, window_bounds = array<i64: 1, 32>}, {transform_indices = @transform_2, window_bounds = array<i64: 1, 1, 1>}]} {
    %c0_i32 = arith.constant 0 : i32
    %0 = arith.cmpi eq, %arg1, %c0_i32 : i32
    %1 = arith.extui %0 : i1 to i32
    %c0_i32_0 = arith.constant 0 : i32
    %2 = arith.cmpi ne, %1, %c0_i32_0 : i32
    scf.if %2 {
      %cst_9 = arith.constant 0.000000e+00 : f32
      %15 = vector.broadcast %cst_9 : f32 to vector<1x32xf32>
      %c0_10 = arith.constant 0 : index
      %c0_11 = arith.constant 0 : index
      %16 = vector.load %arg6[%c0_10, %c0_11] : memref<1x32xf32, #tpu.memory_space<vmem>>, vector<1x32xf32>
      tpu.vector_store %arg6[%c0_10, %c0_11], %15 {strides = array<i32>} : memref<1x32xf32, #tpu.memory_space<vmem>>, vector<1x32xf32>,
    } else {
    }
    %c8_i32 = arith.constant 8 : i32
    %3 = arith.muli %arg0, %c8_i32 : i32
    %c4_i32 = arith.constant 4 : i32
    %4 = arith.muli %arg1, %c4_i32 : i32
    %5 = arith.addi %3, %4 : i32
    %c0 = arith.constant 0 : index
    %c0_1 = arith.constant 0 : index
    %6 = vector.load %arg6[%c0, %c0_1] : memref<1x32xf32, #tpu.memory_space<vmem>>, vector<1x32xf32>
    %cst = arith.constant 0.000000e+00 : f32
    %7 = vector.broadcast %cst : f32 to vector<1x32xf32>
    %c0_i32_2 = arith.constant 0 : i32
    %c4_i32_3 = arith.constant 4 : i32
    %8 = arith.addi %c0_i32_2, %c4_i32_3 : i32
    %c1_i32 = arith.constant 1 : i32
    %9 = scf.for %arg7 = %c0_i32_2 to %8 step %c1_i32 iter_args(%arg8 = %7) -> (vector<1x32xf32>)  : i32 {
      %15 = arith.addi %5, %arg7 : i32
      %16 = arith.index_cast %15 : i32 to index
      %17 = memref.load %arg2[%16] : memref<16xi32, #tpu.memory_space<smem>>
      %18 = arith.index_cast %17 : i32 to index
      %c0_9 = arith.constant 0 : index
      %19 = vector.load %arg3[%18, %c0_9] : memref<64x32xf32, #tpu.memory_space<vmem>>, vector<1x32xf32>
      %20 = arith.addf %arg8, %19 : vector<1x32xf32>
      scf.yield %20 : vector<1x32xf32>
    }
    %c4_i32_4 = arith.constant 4 : i32
    %10 = arith.addf %6, %9 : vector<1x32xf32>
    %c0_5 = arith.constant 0 : index
    %c0_6 = arith.constant 0 : index
    %11 = vector.load %arg6[%c0_5, %c0_6] : memref<1x32xf32, #tpu.memory_space<vmem>>, vector<1x32xf32>
    tpu.vector_store %arg6[%c0_5, %c0_6], %10 {strides = array<i32>} : memref<1x32xf32, #tpu.memory_space<vmem>>, vector<1x32xf32>,
    %c1_i32_7 = arith.constant 1 : i32
    %12 = arith.cmpi eq, %arg1, %c1_i32_7 : i32
    %13 = arith.extui %12 : i1 to i32
    %c0_i32_8 = arith.constant 0 : i32
    %14 = arith.cmpi ne, %13, %c0_i32_8 : i32
    scf.if %14 {
      %c0_9 = arith.constant 0 : index
      %c0_10 = arith.constant 0 : index
      %15 = vector.load %arg6[%c0_9, %c0_10] : memref<1x32xf32, #tpu.memory_space<vmem>>, vector<1x32xf32>
      %c0_11 = arith.constant 0 : index
      %c0_12 = arith.constant 0 : index
      %16 = vector.load %arg4[%c0_11, %c0_12] : memref<1x32xf32, #tpu.memory_space<vmem>>, vector<1x32xf32>
      %17 = arith.mulf %15, %16 : vector<1x32xf32>
      %cst_13 = arith.constant dense<0.000000e+00> : vector<1xf32>
      %18 = vector.multi_reduction <add>, %17, %cst_13 [1] : vector<1x32xf32> to vector<1xf32>
      %19 = vector.shape_cast %18 : vector<1xf32> to vector<1x1xf32>
      %c0_14 = arith.constant 0 : index
      %c0_15 = arith.constant 0 : index
      %c0_16 = arith.constant 0 : index
      %20 = vector.load %arg5[%c0_14, %c0_15, %c0_16] : memref<1x1x1xf32, #tpu.memory_space<vmem>>, vector<1x1x1xf32>
      %21 = vector.shape_cast %20 : vector<1x1x1xf32> to vector<1x1xf32>
      %22 = vector.shape_cast %19 : vector<1x1xf32> to vector<1x1x1xf32>
      tpu.vector_store %arg5[%c0_14, %c0_15, %c0_16], %22 {strides = array<i32>} : memref<1x1x1xf32, #tpu.memory_space<vmem>>, vector<1x1x1xf32>,
    } else {
    }
    return
  }
  func.func @transform_0(%arg0: i32, %arg1: i32, %arg2: memref<16xi32, #tpu.memory_space<smem>>) -> (i32, i32) {
    %c0_i32 = arith.constant 0 : i32
    %c0_i32_0 = arith.constant 0 : i32
    %c0_i32_1 = arith.constant 0 : i32
    return %c0_i32, %c0_i32_0 : i32, i32
  }
  func.func @transform_1(%arg0: i32, %arg1: i32, %arg2: memref<16xi32, #tpu.memory_space<smem>>) -> (i32, i32) {
    %c0_i32 = arith.constant 0 : i32
    %c0_i32_0 = arith.constant 0 : i32
    %c0_i32_1 = arith.constant 0 : i32
    return %c0_i32, %c0_i32_0 : i32, i32
  }
  func.func @transform_2(%arg0: i32, %arg1: i32, %arg2: memref<16xi32, #tpu.memory_space<smem>>) -> (i32, i32, i32) {
    %c0_i32 = arith.constant 0 : i32
    %c0_i32_0 = arith.constant 0 : i32
    %c0_i32_1 = arith.constant 0 : i32
    return %arg0, %c0_i32, %c0_i32_0 : i32, i32, i32
  }
}

</mosaic_0001>

<llo_original>
// kernel: tpu_custom_call.1
$region0: #{tpu_custom_call.1}
  #allocation0 [shape = 'u32[]', space=smem, size = 0x4, offset = 0x4, fixed_abs, tag = 'smem constant byte address 0x4 - core index']
  #allocation1 [shape = 'u32[144,128]{1,0:T(1,128)}', space=vmem, size = 0x12000, scoped, tag = 'internal scratch']
  #allocation2 [shape = 'f32[1,32]{1,0:T(1,128)}', space=vmem, size = 0x200, scoped, tag = 'scratch operand']
  #allocation3 [shape = 's32[1]{0}', space=sflag, size = 0x4, scoped, tag = 'scoped memory for tpu_custom_call.1']
  #allocation4 [shape = 'u8[512]{0}', space=smem, size = 0x200, scoped, tag = 'prefetched SMEM operand 0']
  %s0 = inlined_call_operand.vmem [shape: s32[16], index: 0, kind: input, shape index: {}]
  %s1 = inlined_call_operand.vmem [shape: f32[64,32], index: 1, kind: input, shape index: {}]
  %s2 = inlined_call_operand.vmem [shape: f32[1,32], index: 2, kind: input, shape index: {}]
  %s3 = inlined_call_operand.vmem [shape: f32[2,1,1], index: 3, kind: output, shape index: {}]
  %s4 = sld [smem:[#allocation0]]
  $region56: #{tpu_custom_call.1} parent=0
    _
  %s6 = ssub.s32 1, %s4
  %s7 = scalar_select 0, %s6, %s4
  %s8 = sshll.u32 %s0, 4
  %s9 = int_to_ptr.vmem [resolvable:$true] %s8
  %11 = dma.vmem_to_smem %s9, 16, [#allocation4], [#allocation3]
  %12 = dma.done [#allocation3], 16
  %13 = sfence
  loop: start=0, step=1, limit=6
  $region2: #{tpu_custom_call.1} parent=0 // loop_pre_header
    _
  $region3: #{tpu_custom_call.1} parent=0 // loop_header
    %s15 = sphi 0, %s19
    %p16 = scmp.ge.s32.totalorder %s15, 6
    %s22 = sphi 0, %s34
    %s23 = sphi 0, %s30
    %s24 = sphi 0, %s22
    %s25 = sphi 0, %s23
    %s26 = sphi 0, %s24
    %s27 = sphi 0, %s25
    %s35 = sphi 0, %s35
    %s37 = sphi 0, %s35
    %s38 = sphi 0, %s37
    %s52 = sphi 0, %s38
    %s56 = sphi 0, %s56
    %s58 = sphi 0, %s56
    %s59 = sphi 0, %s58
    %s73 = sphi 0, %s59
    %s79 = sphi 0, %s81
    %s82 = sphi 0, %s79
    %s83 = sphi 0, %s82
    %s99 = sphi 0, %s83
  $region4: #{tpu_custom_call.1} parent=0 // loop_header_branch
    %18 = sbr.rel (%p16) target = $region8
  $region5: #{tpu_custom_call.1} parent=0 // loop_body
    %s20 = ssub.s32 %s15, 1
    %s21 = ssub.s32 %s15, 2
    %s28 = sadd.s32 1, %s23
    %p29 = scmp.ge.s32.totalorder %s28, 2
    %s30 = scalar_select %p29, 0, %s28
    %s31 = sadd.s32 1, %s22
    %s32 = scalar_select %p29, %s31, %s22
    %p33 = scmp.ge.s32.totalorder %s32, 2
    %s34 = scalar_select %p33, 0, %s32
    %s36 = sadd.s32 %s35, 1
    %p39 = scmp.eq.s32.totalorder %s15, 3
    %p40 = scmp.ne.s32.totalorder %s35, %s37
    %p41 = scmp.eq.s32.totalorder %s15, 0
    %p42 = por %p40, %p41
    %p43 = scmp.ne.s32.totalorder %s35, %s37
    %p44 = scmp.eq.s32.totalorder %s20, 3
    %p45 = por %p43, %p44
    %p46 = scmp.ne.s32.totalorder %s37, %s38
    %p47 = scmp.eq.s32.totalorder %s20, 0
    %p48 = por %p46, %p47
    %p49 = scmp.ne.s32.totalorder %s37, %s38
    %p50 = scmp.eq.s32.totalorder %s21, 3
    %p51 = por %p49, %p50
    %p53 = scmp.ne.s32.totalorder %s38, %s52
    %p54 = scmp.eq.s32.totalorder %s21, 0
    %p55 = por %p53, %p54
    %s57 = sadd.s32 %s56, 1
    %p60 = scmp.eq.s32.totalorder %s15, 3
    %p61 = scmp.ne.s32.totalorder %s56, %s58
    %p62 = scmp.eq.s32.totalorder %s15, 0
    %p63 = por %p61, %p62
    %p64 = scmp.ne.s32.totalorder %s56, %s58
    %p65 = scmp.eq.s32.totalorder %s20, 3
    %p66 = por %p64, %p65
    %p67 = scmp.ne.s32.totalorder %s58, %s59
    %p68 = scmp.eq.s32.totalorder %s20, 0
    %p69 = por %p67, %p68
    %p70 = scmp.ne.s32.totalorder %s58, %s59
    %p71 = scmp.eq.s32.totalorder %s21, 3
    %p72 = por %p70, %p71
    %p74 = scmp.ne.s32.totalorder %s59, %s73
    %p75 = scmp.eq.s32.totalorder %s21, 0
    %p76 = por %p74, %p75
    %s77 = ssub.s32 %s22, %s34
    %p78 = scmp.eq.s32.totalorder %s77, 0
    %s80 = sadd.s32 %s79, 1
    %s81 = scalar_select %p78, %s79, %s80
    %p84 = pneg %p78
    %p85 = scmp.eq.s32.totalorder %s15, 3
    %p86 = por %p84, %p85
    %p87 = scmp.ne.s32.totalorder %s79, %s82
    %p88 = scmp.eq.s32.totalorder %s15, 0
    %p89 = por %p87, %p88
    %p90 = scmp.ne.s32.totalorder %s79, %s82
    %p91 = scmp.eq.s32.totalorder %s20, 3
    %p92 = por %p90, %p91
    %p93 = scmp.ne.s32.totalorder %s82, %s83
    %p94 = scmp.eq.s32.totalorder %s20, 0
    %p95 = por %p93, %p94
    %p96 = scmp.ne.s32.totalorder %s82, %s83
    %p97 = scmp.eq.s32.totalorder %s21, 3
    %p98 = por %p96, %p97
    %p100 = scmp.ne.s32.totalorder %s83, %s99
    %p101 = scmp.eq.s32.totalorder %s21, 0
    %p102 = por %p100, %p101
    %p103 = scmp.le.s32.totalorder 1, %s15
    %p104 = scmp.lt.s32.totalorder %s15, 5
    %p105 = pnand %p103, %p104
    %p106 = pneg %p105
    // Predicated region
    $region9: #{tpu_custom_call.1} parent=5 // pred_check
      _
    $region10: #{tpu_custom_call.1} parent=5 // pred_check_branch
      %108 = sbr.rel (%p105) target = $region12
    $region11: #{tpu_custom_call.1} parent=5 // pred_region
      %s109 = ssub.s32 %s15, 1
      // Predicated region
      $region13: #{tpu_custom_call.1} parent=11 // pred_check
        %p110 = pneg %p48
      $region14: #{tpu_custom_call.1} parent=11 // pred_check_branch
        %112 = sbr.rel (%p110) target = $region16
      $region15: #{tpu_custom_call.1} parent=11 // pred_region
        _
      $region16: #{tpu_custom_call.1} parent=11 // pred_fallthru
        _
      // Predicated region
      $region17: #{tpu_custom_call.1} parent=11 // pred_check
        %p113 = pneg %p69
      $region18: #{tpu_custom_call.1} parent=11 // pred_check_branch
        %115 = sbr.rel (%p113) target = $region20
      $region19: #{tpu_custom_call.1} parent=11 // pred_region
        _
      $region20: #{tpu_custom_call.1} parent=11 // pred_fallthru
        _
    $region12: #{tpu_custom_call.1} parent=5 // pred_fallthru
      _
    %p116 = scmp.lt.s32.totalorder %s15, 4
    // Predicated region
    $region21: #{tpu_custom_call.1} parent=5 // pred_check
      %p117 = pneg %p116
    $region22: #{tpu_custom_call.1} parent=5 // pred_check_branch
      %119 = sbr.rel (%p117) target = $region24
    $region23: #{tpu_custom_call.1} parent=5 // pred_region
      _
    $region24: #{tpu_custom_call.1} parent=5 // pred_fallthru
      _
    %p120 = scmp.le.s32.totalorder 1, %s15
    %p121 = scmp.lt.s32.totalorder %s15, 5
    %p122 = pnand %p120, %p121
    %p123 = pneg %p122
    // Predicated region
    $region25: #{tpu_custom_call.1} parent=5 // pred_check
      _
    $region26: #{tpu_custom_call.1} parent=5 // pred_check_branch
      %125 = sbr.rel (%p122) target = $region28
    $region27: #{tpu_custom_call.1} parent=5 // pred_region
      %s126 = ssub.s32 %s15, 1
      %p127 = pneg %p48
      %p128 = pneg %p45
      %p129 = pneg %p69
      %p130 = pneg %p66
      %p131 = pneg %p95
      %p132 = pneg %p92
      %p133 = scmp.lt.s32.totalorder %s24, 1
      %s134 = scalar_select %p133, %s24, 1
      %s135 = scalar_lea.vmem %s3, %s134
      %p136 = scmp.lt.s32.totalorder %s24, 1
      %s137 = scalar_select %p136, %s24, 1
      %s138 = scalar_lea.vmem %s3, %s137
      %p139 = scmp.eq.s32.totalorder %s25, 0
      // Predicated region
      $region29: #{tpu_custom_call.1} parent=27 // pred_check
        %p140 = pneg %p139
      $region30: #{tpu_custom_call.1} parent=27 // pred_check_branch
        %142 = sbr.rel (%p140) target = $region32
      $region31: #{tpu_custom_call.1} parent=27 // pred_region
        %vm143 = vcmask 253952
        %144 = vst.msk [vmem:[#allocation2] sm:$0x1] %vm143, 0.0
      $region32: #{tpu_custom_call.1} parent=27 // pred_fallthru
        _
      %s145 = smul.u32 %s24, 8
      %s146 = smul.u32 %s25, 4
      %s147 = sadd.s32 %s145, %s146
      %v148 = vld [vmem:[#allocation2] sm:$0x1]
      loop: start=0, step=1, limit=4
      $region33: #{tpu_custom_call.1} parent=27 // loop_pre_header
        _
      $region34: #{tpu_custom_call.1} parent=27 // loop_header
        %s150 = sphi 0, %s154
        %p151 = scmp.ge.s32.totalorder %s150, 4
        %v155 = vphi 0.0, %v160
      $region35: #{tpu_custom_call.1} parent=27 // loop_header_branch
        %153 = sbr.rel (%p151) target = $region39
      $region36: #{tpu_custom_call.1} parent=27 // loop_body
        %s156 = sadd.s32 %s147, %s150
        %s157 = sld [smem:[#allocation4 + %s156]]
        %s158 = scalar_lea.vmem %s1, %s157
        %v159 = vld [vmem:[%s158] sm:$0x1]
        %v160 = vadd.f32 %v155, %v159
      $region37: #{tpu_custom_call.1} parent=27 // loop_footer
        %s154 = sadd.s32 1, %s150
      $region38: #{tpu_custom_call.1} parent=27 // loop_footer_branch
        %149 = sbr.rel target = $region34
      $region39: #{tpu_custom_call.1} parent=27 // loop_exit
        _
      %v161 = vadd.f32 %v148, %v155
      %vm162 = vcmask 253952
      %163 = vst.msk [vmem:[#allocation2] sm:$0x1] %vm162, %v161
      %p164 = scmp.eq.s32.totalorder %s25, 1
      // Predicated region
      $region40: #{tpu_custom_call.1} parent=27 // pred_check
        %p165 = pneg %p164
      $region41: #{tpu_custom_call.1} parent=27 // pred_check_branch
        %167 = sbr.rel (%p165) target = $region43
      $region42: #{tpu_custom_call.1} parent=27 // pred_region
        %v168 = vld [vmem:[#allocation2] sm:$0x1]
        %v169 = vld [vmem:[%s2] sm:$0x1]
        %v170 = vmul.f32 %v168, %v169
        %v171 = vsel %vm162, %v170, 0.0
        %172 = vadd.xlane.f32.xlu0 %v171
        %v173 = vpop.xlane.xlu0 %172
        %vm174 = vcmask 0
        %175 = vst.msk [vmem:[%s138] sm:$0x1] %vm174, %v173
      $region43: #{tpu_custom_call.1} parent=27 // pred_fallthru
        _
      %p176 = scmp.lt.s32.totalorder %s24, 1
      %s177 = scalar_select %p176, %s24, 1
      %s178 = scalar_lea.vmem %s3, %s177
      // Predicated region
      $region44: #{tpu_custom_call.1} parent=27 // pred_check
        %p179 = pneg %p92
      $region45: #{tpu_custom_call.1} parent=27 // pred_check_branch
        %181 = sbr.rel (%p179) target = $region47
      $region46: #{tpu_custom_call.1} parent=27 // pred_region
        _
      $region47: #{tpu_custom_call.1} parent=27 // pred_fallthru
        _
    $region28: #{tpu_custom_call.1} parent=5 // pred_fallthru
      _
    %p182 = scmp.le.s32.totalorder 2, %s15
    // Predicated region
    $region48: #{tpu_custom_call.1} parent=5 // pred_check
      %p183 = pneg %p182
    $region49: #{tpu_custom_call.1} parent=5 // pred_check_branch
      %185 = sbr.rel (%p183) target = $region51
    $region50: #{tpu_custom_call.1} parent=5 // pred_region
      %s186 = ssub.s32 %s15, 2
      // Predicated region
      $region52: #{tpu_custom_call.1} parent=50 // pred_check
        %p187 = pneg %p98
      $region53: #{tpu_custom_call.1} parent=50 // pred_check_branch
        %189 = sbr.rel (%p187) target = $region55
      $region54: #{tpu_custom_call.1} parent=50 // pred_region
        %p190 = scmp.lt.s32.totalorder %s26, 1
        %s191 = scalar_select %p190, %s26, 1
        %s192 = scalar_lea.vmem %s3, %s191
      $region55: #{tpu_custom_call.1} parent=50 // pred_fallthru
        _
    $region51: #{tpu_custom_call.1} parent=5 // pred_fallthru
      _
  $region6: #{tpu_custom_call.1} parent=0 // loop_footer
    %s19 = sadd.s32 1, %s15
  $region7: #{tpu_custom_call.1} parent=0 // loop_footer_branch
    %14 = sbr.rel target = $region3
  $region8: #{tpu_custom_call.1} parent=0 // loop_exit
    _

</llo_original>
